<compile_context>
chip_gen: v7x
topology: tpu7x:2x2x1
jax: 0.10.0
libtpu: 0.0.40
codegen_flags: <defaults>
</compile_context>

<pallas_src>
import jax
import jax.numpy as jnp
from jax.experimental import pallas as pl
from jax.experimental.pallas import tpu as pltpu


# ----------------------------- fused CBAM kernel -----------------------------
def cbam_fused_kernel(x_ref, w1t_ref, b1_ref, w2t_ref, b2_ref,
                      cm_ref, bc_ref, o_ref):
    """Block of batch elements: channel attn -> scale -> spatial attn -> scale.

    x_ref:   (Bt, C, HW) VMEM, HW = H*W (lane-dense last axis)
    w1t_ref: (C, mid)    first Linear weight, pre-transposed
    b1_ref:  (1, mid)    first Linear bias (row)
    w2t_ref: (mid, C)    second Linear weight, pre-transposed
    b2_ref:  (1, C)      second Linear bias (row)
    cm_ref:  (2, HW, HW) padding-aware 7x7 conv matrices (avg-branch, max-branch)
    bc_ref:  (1,)        conv bias in SMEM
    o_ref:   (Bt, C, HW) output
    """
    x = x_ref[...]                                          # (Bt, C, HW) f32
    _, C, HW = x.shape

    # ---- channel attention: global avg/max pool over HW (lane reductions) ---
    avg = jnp.sum(x, axis=2) * (1.0 / HW)                   # (Bt, C)
    mx = jnp.max(x, axis=2)                                 # (Bt, C)

    # Shared MLP, batched over Bt; ReLU per branch BEFORE summing, bias folded
    # as 2*b2 on the second layer:  mlp(avg)+mlp(max) = (h_a+h_m) @ w2.T + 2*b2
    h_a = jnp.maximum(
        jnp.dot(avg, w1t_ref[...], preferred_element_type=jnp.float32)
        + b1_ref[...], 0.0)                                 # (Bt, mid)
    h_m = jnp.maximum(
        jnp.dot(mx, w1t_ref[...], preferred_element_type=jnp.float32)
        + b1_ref[...], 0.0)                                 # (Bt, mid)
    z = jnp.dot(h_a + h_m, w2t_ref[...],
                preferred_element_type=jnp.float32) + 2.0 * b2_ref[...]  # (Bt, C)
    attn_c = jax.nn.sigmoid(z)                              # (Bt, C)

    y = x * attn_c[:, :, None]                              # channel-scaled

    # ---- spatial attention: channel mean/max -> 7x7 conv (as MXU matmul) ----
    s_avg = jnp.sum(y, axis=1) * (1.0 / C)                  # (Bt, HW)
    s_max = jnp.max(y, axis=1)                              # (Bt, HW)

    conv = (jnp.dot(s_avg, cm_ref[0], preferred_element_type=jnp.float32)
            + jnp.dot(s_max, cm_ref[1], preferred_element_type=jnp.float32)
            + bc_ref[0])                                    # (Bt, HW)
    attn_s = jax.nn.sigmoid(conv)                           # (Bt, HW)

    o_ref[...] = y * attn_s[:, None, :]                     # broadcast over C


# ------------------- conv-as-matmul weight matrix (wrapper) -------------------
def build_conv_matrices(wconv, H, W):
    """(1, 2, 7, 7) conv weight -> (2, HW, HW) zero-padding-aware matrices.

    conv[p] = sum_q s[q] * M[q, p], with M[q, p] = w[qy-py+3, qx-px+3] when the
    offset is inside the 7x7 window, else 0 (zero padding handled implicitly
    because out-of-image taps simply have no source row).
    """
    HW = H * W
    wflat = wconv.reshape(2, 49)
    p = jnp.arange(HW)
    py, px = p // W, p % W
    dy = py[:, None] - py[None, :]                          # (HW_in, HW_out)
    dx = px[:, None] - px[None, :]
    valid = (jnp.abs(dy) <= 3) & (jnp.abs(dx) <= 3)
    kidx = jnp.where(valid, (dy + 3) * 7 + (dx + 3), 0)     # safe gather index
    taps = jnp.take(wflat, kidx, axis=1)                    # (2, HW, HW)
    return jnp.where(valid[None], taps, 0.0).astype(jnp.float32)


# ----------------------------- wrapper ---------------------------------------
def cbam_forward(x, params, *, block_b=None):
    B, C, H, W = x.shape
    mid = params["w1"].shape[0]
    HW = H * W
    x2 = x.reshape(B, C, HW).astype(jnp.float32)

    # Batch block: >=2 grid steps when possible (both v7x TCs busy), otherwise
    # as fat as possible to amortize per-step overhead on single-TC chips.
    if block_b is None:
        block_b = B // 2 if (B >= 2 and B % 2 == 0) else 1
    assert B % block_b == 0
    num_blocks = B // block_b

    conv_mat = build_conv_matrices(params["wconv"], H, W)   # (2, HW, HW)

    flops = int(B * (4 * HW * HW + 8 * C * mid + 6 * C * HW))
    transcendentals = int(B * (C + HW))
    bytes_accessed = int(2 * B * C * HW * 4 + conv_mat.size * 4
                         + 2 * C * mid * 4)

    y2 = pl.pallas_call(
        cbam_fused_kernel,
        out_shape=jax.ShapeDtypeStruct((B, C, HW), jnp.float32),
        grid=(num_blocks,),
        in_specs=[
            pl.BlockSpec((block_b, C, HW), lambda b: (b, 0, 0)),
            pl.BlockSpec((C, mid), lambda b: (0, 0)),
            pl.BlockSpec((1, mid), lambda b: (0, 0)),
            pl.BlockSpec((mid, C), lambda b: (0, 0)),
            pl.BlockSpec((1, C), lambda b: (0, 0)),
            pl.BlockSpec((2, HW, HW), lambda b: (0, 0, 0)),
            pl.BlockSpec(memory_space=pltpu.MemorySpace.SMEM),   # conv bias (1,)
        ],
        out_specs=pl.BlockSpec((block_b, C, HW), lambda b: (b, 0, 0)),
        compiler_params=pltpu.CompilerParams(
            dimension_semantics=("parallel",)),
        cost_estimate=pl.CostEstimate(
            flops=flops, transcendentals=transcendentals,
            bytes_accessed=bytes_accessed),
    )(x2,
      params["w1"].T, params["b1"].reshape(1, mid),
      params["w2"].T, params["b2"].reshape(1, C),
      conv_mat, params["bconv"])

    return y2.reshape(B, C, H, W)


# ----------------------------- reference (pure JAX) ---------------------------
def cbam_reference(x, p):
    avg = x.mean(axis=(2, 3))
    mx = x.max(axis=(2, 3))

    def mlp(v):
        h = jnp.maximum(v @ p["w1"].T + p["b1"], 0.0)
        return h @ p["w2"].T + p["b2"]

    attn_c = jax.nn.sigmoid(mlp(avg) + mlp(mx))[:, :, None, None]
    y = attn_c * x

    s = jnp.concatenate(
        [y.mean(axis=1, keepdims=True), y.max(axis=1, keepdims=True)], axis=1)
    conv = jax.lax.conv_general_dilated(
        s, p["wconv"], window_strides=(1, 1), padding=[(3, 3), (3, 3)],
        dimension_numbers=("NCHW", "OIHW", "NCHW"))
    attn_s = jax.nn.sigmoid(conv + p["bconv"].reshape(1, 1, 1, 1))
    return attn_s * y


# ----------------------------- params -----------------------------------------
def init_params(key, in_channels, reduction=16):
    mid = in_channels // reduction
    ks = jax.random.split(key, 6)
    return dict(
        w1=jax.random.normal(ks[0], (mid, in_channels), jnp.float32) * 0.1,
        b1=jax.random.normal(ks[1], (mid,), jnp.float32) * 0.1,
        w2=jax.random.normal(ks[2], (in_channels, mid), jnp.float32) * 0.1,
        b2=jax.random.normal(ks[3], (in_channels,), jnp.float32) * 0.1,
        wconv=jax.random.normal(ks[4], (1, 2, 7, 7), jnp.float32) * 0.1,
        bconv=jax.random.normal(ks[5], (1,), jnp.float32) * 0.1,
    )


if __name__ == "__main__":
    # in_channels must be >= reduction (16) for the PyTorch module to be valid.
    B, C, H, W = 2, 32, 16, 16
    key = jax.random.PRNGKey(0)
    kx, kp = jax.random.split(key)
    x = jax.random.normal(kx, (B, C, H, W), jnp.float32)
    params = init_params(kp, C)

    out = cbam_forward(x, params)
    out = jax.block_until_ready(out)

    ref = jax.block_until_ready(cbam_reference(x, params))
    assert out.shape == ref.shape == (B, C, H, W)
    assert jnp.allclose(out, ref, rtol=1e-4, atol=1e-4), float(jnp.max(jnp.abs(out - ref)))

    print("KERNEL_OK")
</pallas_src>

<mosaic_0001>
module attributes {stable_mosaic.version = 11 : i64} {
  func.func @cbam_fused_kernel(%arg0: i32, %arg1: memref<1x32x256xf32, #tpu.memory_space<vmem>>, %arg2: memref<32x2xf32, #tpu.memory_space<vmem>>, %arg3: memref<1x2xf32, #tpu.memory_space<vmem>>, %arg4: memref<2x32xf32, #tpu.memory_space<vmem>>, %arg5: memref<1x32xf32, #tpu.memory_space<vmem>>, %arg6: memref<2x256x256xf32, #tpu.memory_space<vmem>>, %arg7: memref<1xf32, #tpu.memory_space<smem>>, %arg8: memref<1x32x256xf32, #tpu.memory_space<vmem>>) attributes {dimension_semantics = [#tpu.dimension_semantics<parallel>], iteration_bounds = array<i64: 2>, scalar_prefetch = 0 : i64, scratch_operands = 0 : i64, tpu.core_type = #tpu.core_type<tc>, window_params = [{transform_indices = @transform_0, window_bounds = array<i64: 1, 32, 256>}, {pipeline_mode = #tpu.pipeline_mode<synchronous>, transform_indices = @transform_1, window_bounds = array<i64: 32, 2>}, {pipeline_mode = #tpu.pipeline_mode<synchronous>, transform_indices = @transform_2, window_bounds = array<i64: 1, 2>}, {pipeline_mode = #tpu.pipeline_mode<synchronous>, transform_indices = @transform_3, window_bounds = array<i64: 2, 32>}, {pipeline_mode = #tpu.pipeline_mode<synchronous>, transform_indices = @transform_4, window_bounds = array<i64: 1, 32>}, {pipeline_mode = #tpu.pipeline_mode<synchronous>, transform_indices = @transform_5, window_bounds = array<i64: 2, 256, 256>}, {transform_indices = @transform_6, window_bounds = array<i64: 1>}, {transform_indices = @transform_7, window_bounds = array<i64: 1, 32, 256>}]} {
    %c0 = arith.constant 0 : index
    %c0_0 = arith.constant 0 : index
    %c0_1 = arith.constant 0 : index
    %0 = vector.load %arg1[%c0, %c0_0, %c0_1] : memref<1x32x256xf32, #tpu.memory_space<vmem>>, vector<1x32x256xf32>
    %cst = arith.constant dense<0.000000e+00> : vector<1x32xf32>
    %1 = vector.multi_reduction <add>, %0, %cst [2] : vector<1x32x256xf32> to vector<1x32xf32>
    %cst_2 = arith.constant 3.906250e-03 : f32
    %2 = vector.broadcast %cst_2 : f32 to vector<1x32xf32>
    %3 = arith.mulf %1, %2 : vector<1x32xf32>
    %cst_3 = arith.constant dense<0xFF800000> : vector<1x32xf32>
    %4 = vector.multi_reduction <maximumf>, %0, %cst_3 [2] : vector<1x32x256xf32> to vector<1x32xf32>
    %c0_4 = arith.constant 0 : index
    %c0_5 = arith.constant 0 : index
    %5 = vector.load %arg2[%c0_4, %c0_5] : memref<32x2xf32, #tpu.memory_space<vmem>>, vector<32x2xf32>
    %cst_6 = arith.constant dense<0.000000e+00> : vector<1x2xf32>
    %6 = tpu.matmul %3, %5, %cst_6 {dimension_numbers = #tpu.dot_dimension_numbers<[1], [0], [0], [1], [0, 0, 1, 1], [], []>} : vector<1x32xf32>, vector<32x2xf32>, vector<1x2xf32> -> vector<1x2xf32>
    %c0_7 = arith.constant 0 : index
    %c0_8 = arith.constant 0 : index
    %7 = vector.load %arg3[%c0_7, %c0_8] : memref<1x2xf32, #tpu.memory_space<vmem>>, vector<1x2xf32>
    %8 = arith.addf %6, %7 : vector<1x2xf32>
    %cst_9 = arith.constant 0.000000e+00 : f32
    %9 = vector.broadcast %cst_9 : f32 to vector<1x2xf32>
    %10 = arith.maximumf %8, %9 : vector<1x2xf32>
    %c0_10 = arith.constant 0 : index
    %c0_11 = arith.constant 0 : index
    %11 = vector.load %arg2[%c0_10, %c0_11] : memref<32x2xf32, #tpu.memory_space<vmem>>, vector<32x2xf32>
    %cst_12 = arith.constant dense<0.000000e+00> : vector<1x2xf32>
    %12 = tpu.matmul %4, %11, %cst_12 {dimension_numbers = #tpu.dot_dimension_numbers<[1], [0], [0], [1], [0, 0, 1, 1], [], []>} : vector<1x32xf32>, vector<32x2xf32>, vector<1x2xf32> -> vector<1x2xf32>
    %c0_13 = arith.constant 0 : index
    %c0_14 = arith.constant 0 : index
    %13 = vector.load %arg3[%c0_13, %c0_14] : memref<1x2xf32, #tpu.memory_space<vmem>>, vector<1x2xf32>
    %14 = arith.addf %12, %13 : vector<1x2xf32>
    %cst_15 = arith.constant 0.000000e+00 : f32
    %15 = vector.broadcast %cst_15 : f32 to vector<1x2xf32>
    %16 = arith.maximumf %14, %15 : vector<1x2xf32>
    %17 = arith.addf %10, %16 : vector<1x2xf32>
    %c0_16 = arith.constant 0 : index
    %c0_17 = arith.constant 0 : index
    %18 = vector.load %arg4[%c0_16, %c0_17] : memref<2x32xf32, #tpu.memory_space<vmem>>, vector<2x32xf32>
    %cst_18 = arith.constant dense<0.000000e+00> : vector<1x32xf32>
    %19 = tpu.matmul %17, %18, %cst_18 {dimension_numbers = #tpu.dot_dimension_numbers<[1], [0], [0], [1], [0, 0, 1, 1], [], []>} : vector<1x2xf32>, vector<2x32xf32>, vector<1x32xf32> -> vector<1x32xf32>
    %c0_19 = arith.constant 0 : index
    %c0_20 = arith.constant 0 : index
    %20 = vector.load %arg5[%c0_19, %c0_20] : memref<1x32xf32, #tpu.memory_space<vmem>>, vector<1x32xf32>
    %cst_21 = arith.constant 2.000000e+00 : f32
    %21 = vector.broadcast %cst_21 : f32 to vector<1x32xf32>
    %22 = arith.mulf %21, %20 : vector<1x32xf32>
    %23 = arith.addf %19, %22 : vector<1x32xf32>
    %24 = arith.negf %23 : vector<1x32xf32>
    %25 = math.exp %24 : vector<1x32xf32>
    %cst_22 = arith.constant 1.000000e+00 : f32
    %26 = vector.broadcast %cst_22 : f32 to vector<1x32xf32>
    %27 = arith.addf %26, %25 : vector<1x32xf32>
    %28 = arith.divf %26, %27 : vector<1x32xf32>
    %29 = vector.shape_cast %28 : vector<1x32xf32> to vector<1x32x1xf32>
    %30 = vector.broadcast %29 : vector<1x32x1xf32> to vector<1x32x256xf32>
    %31 = arith.mulf %0, %30 : vector<1x32x256xf32>
    %cst_23 = arith.constant dense<0.000000e+00> : vector<1x256xf32>
    %32 = vector.multi_reduction <add>, %31, %cst_23 [1] : vector<1x32x256xf32> to vector<1x256xf32>
    %cst_24 = arith.constant 3.125000e-02 : f32
    %33 = vector.broadcast %cst_24 : f32 to vector<1x256xf32>
    %34 = arith.mulf %32, %33 : vector<1x256xf32>
    %cst_25 = arith.constant dense<0xFF800000> : vector<1x256xf32>
    %35 = vector.multi_reduction <maximumf>, %31, %cst_25 [1] : vector<1x32x256xf32> to vector<1x256xf32>
    %c0_26 = arith.constant 0 : index
    %c0_27 = arith.constant 0 : index
    %c0_28 = arith.constant 0 : index
    %36 = vector.load %arg6[%c0_26, %c0_27, %c0_28] : memref<2x256x256xf32, #tpu.memory_space<vmem>>, vector<1x256x256xf32>
    %37 = vector.shape_cast %36 : vector<1x256x256xf32> to vector<256x256xf32>
    %cst_29 = arith.constant dense<0.000000e+00> : vector<1x256xf32>
    %38 = tpu.matmul %34, %37, %cst_29 {dimension_numbers = #tpu.dot_dimension_numbers<[1], [0], [0], [1], [0, 0, 1, 1], [], []>} : vector<1x256xf32>, vector<256x256xf32>, vector<1x256xf32> -> vector<1x256xf32>
    %c1 = arith.constant 1 : index
    %c0_30 = arith.constant 0 : index
    %c0_31 = arith.constant 0 : index
    %39 = vector.load %arg6[%c1, %c0_30, %c0_31] : memref<2x256x256xf32, #tpu.memory_space<vmem>>, vector<1x256x256xf32>
    %40 = vector.shape_cast %39 : vector<1x256x256xf32> to vector<256x256xf32>
    %cst_32 = arith.constant dense<0.000000e+00> : vector<1x256xf32>
    %41 = tpu.matmul %35, %40, %cst_32 {dimension_numbers = #tpu.dot_dimension_numbers<[1], [0], [0], [1], [0, 0, 1, 1], [], []>} : vector<1x256xf32>, vector<256x256xf32>, vector<1x256xf32> -> vector<1x256xf32>
    %42 = arith.addf %38, %41 : vector<1x256xf32>
    %c0_33 = arith.constant 0 : index
    %43 = memref.load %arg7[%c0_33] : memref<1xf32, #tpu.memory_space<smem>>
    %44 = vector.broadcast %43 : f32 to vector<1x256xf32>
    %45 = arith.addf %42, %44 : vector<1x256xf32>
    %46 = arith.negf %45 : vector<1x256xf32>
    %47 = math.exp %46 : vector<1x256xf32>
    %cst_34 = arith.constant 1.000000e+00 : f32
    %48 = vector.broadcast %cst_34 : f32 to vector<1x256xf32>
    %49 = arith.addf %48, %47 : vector<1x256xf32>
    %50 = arith.divf %48, %49 : vector<1x256xf32>
    %51 = vector.shape_cast %50 : vector<1x256xf32> to vector<1x1x256xf32>
    %52 = vector.broadcast %51 : vector<1x1x256xf32> to vector<1x32x256xf32>
    %53 = arith.mulf %31, %52 : vector<1x32x256xf32>
    %c0_35 = arith.constant 0 : index
    %c0_36 = arith.constant 0 : index
    %c0_37 = arith.constant 0 : index
    %54 = vector.load %arg8[%c0_35, %c0_36, %c0_37] : memref<1x32x256xf32, #tpu.memory_space<vmem>>, vector<1x32x256xf32>
    tpu.vector_store %arg8[%c0_35, %c0_36, %c0_37], %53 {strides = array<i32>} : memref<1x32x256xf32, #tpu.memory_space<vmem>>, vector<1x32x256xf32>,
    return
  }
  func.func @transform_0(%arg0: i32) -> (i32, i32, i32) {
    %c0_i32 = arith.constant 0 : i32
    %c0_i32_0 = arith.constant 0 : i32
    %c0_i32_1 = arith.constant 0 : i32
    return %arg0, %c0_i32, %c0_i32_0 : i32, i32, i32
  }
  func.func @transform_1(%arg0: i32) -> (i32, i32) {
    %c0_i32 = arith.constant 0 : i32
    %c0_i32_0 = arith.constant 0 : i32
    %c0_i32_1 = arith.constant 0 : i32
    return %c0_i32, %c0_i32_0 : i32, i32
  }
  func.func @transform_2(%arg0: i32) -> (i32, i32) {
    %c0_i32 = arith.constant 0 : i32
    %c0_i32_0 = arith.constant 0 : i32
    %c0_i32_1 = arith.constant 0 : i32
    return %c0_i32, %c0_i32_0 : i32, i32
  }
  func.func @transform_3(%arg0: i32) -> (i32, i32) {
    %c0_i32 = arith.constant 0 : i32
    %c0_i32_0 = arith.constant 0 : i32
    %c0_i32_1 = arith.constant 0 : i32
    return %c0_i32, %c0_i32_0 : i32, i32
  }
  func.func @transform_4(%arg0: i32) -> (i32, i32) {
    %c0_i32 = arith.constant 0 : i32
    %c0_i32_0 = arith.constant 0 : i32
    %c0_i32_1 = arith.constant 0 : i32
    return %c0_i32, %c0_i32_0 : i32, i32
  }
  func.func @transform_5(%arg0: i32) -> (i32, i32, i32) {
    %c0_i32 = arith.constant 0 : i32
    %c0_i32_0 = arith.constant 0 : i32
    %c0_i32_1 = arith.constant 0 : i32
    %c0_i32_2 = arith.constant 0 : i32
    return %c0_i32, %c0_i32_0, %c0_i32_1 : i32, i32, i32
  }
  func.func @transform_6(%arg0: i32) -> i32 {
    %c0_i32 = arith.constant 0 : i32
    %c0_i32_0 = arith.constant 0 : i32
    return %c0_i32 : i32
  }
  func.func @transform_7(%arg0: i32) -> (i32, i32, i32) {
    %c0_i32 = arith.constant 0 : i32
    %c0_i32_0 = arith.constant 0 : i32
    %c0_i32_1 = arith.constant 0 : i32
    return %arg0, %c0_i32, %c0_i32_0 : i32, i32, i32
  }
}

</mosaic_0001>

<llo_original>
// kernel: tpu_custom_call.1
$region0: #{tpu_custom_call.1}
  #allocation0 [shape = 'u32[]', space=smem, size = 0x4, offset = 0x4, fixed_abs, tag = 'smem constant byte address 0x4 - core index']
  #allocation1 [shape = 'u32[144,128]{1,0:T(1,128)}', space=vmem, size = 0x12000, scoped, tag = 'internal scratch']
  #allocation2 [shape = 'f32[1]{0:T(128)S(6)}', space=smem, size = 0x200, scoped, tag = 'scoped memory for tpu_custom_call.1']
  %s0 = inlined_call_operand.hbm [shape: f32[2,32,256], index: 0, kind: input, shape index: {}]
  %s1 = inlined_call_operand.vmem [shape: f32[32,2], index: 1, kind: input, shape index: {}]
  %s2 = inlined_call_operand.vmem [shape: f32[1,2], index: 2, kind: input, shape index: {}]
  %s3 = inlined_call_operand.vmem [shape: f32[2,32], index: 3, kind: input, shape index: {}]
  %s4 = inlined_call_operand.vmem [shape: f32[1,32], index: 4, kind: input, shape index: {}]
  %s5 = inlined_call_operand.hbm [shape: f32[2,256,256], index: 5, kind: input, shape index: {}]
  %s6 = inlined_call_operand.<no memory space> [shape: f32[1], index: 6, kind: input, shape index: {}]
  %s7 = inlined_call_operand.hbm [shape: f32[2,32,256], index: 7, kind: output, shape index: {}]
  %s8 = sld [smem:[#allocation0]]
  $region69: #{tpu_custom_call.1} parent=0
    _
  %s10 = ssub.s32 1, %s8
  %s11 = scalar_select 0, %s10, %s8
  %12 = sst [smem:[#allocation2]] %s6
  $region1: #{tpu_custom_call.1} parent=0
    #allocation3 [shape = 'u8[65536]{0}', space=vmem, size = 0x10000, scoped, tag = 'input window, operand 0']
    #allocation4 [shape = 's32[2]{0}', space=sflag, size = 0x8, scoped, tag = 'scoped memory for tpu_custom_call.1']
    #allocation5 [shape = 's32[2]{0}', space=sflag, size = 0x8, scoped, tag = 'scoped memory for tpu_custom_call.1']
    #allocation6 [shape = 'u8[524288]{0}', space=vmem, size = 0x80000, scoped, tag = 'input window, operand 5, single buffered']
    #allocation7 [shape = 's32[1]{0}', space=sflag, size = 0x4, scoped, tag = 'scoped memory for tpu_custom_call.1']
    #allocation8 [shape = 'u8[65536]{0}', space=vmem, size = 0x10000, scoped, tag = 'output window, operand 0']
    %13 = vsyncpa [#allocation4], 0
    %s14 = scalar_lea.sflag [#allocation4], 1
    %15 = vsyncpa %s14, 0
    %16 = vsyncpa [#allocation7], 0
    %17 = vsyncpa [#allocation5], 0
    %s18 = scalar_lea.sflag [#allocation5], 1
    %19 = vsyncpa %s18, 0
    loop: start=0, step=1, limit=4
    $region2: #{tpu_custom_call.1} parent=1 // loop_pre_header
      _
    $region3: #{tpu_custom_call.1} parent=1 // loop_header
      %s21 = sphi 0, %s25
      %p22 = scmp.ge.s32.totalorder %s21, 4
      %s31 = sphi 0, %s33
      %s34 = sphi 0, %s31
      %s35 = sphi 0, %s34
      %s51 = sphi 0, %s35
      %s55 = sphi 0, %s55
      %s57 = sphi 0, %s55
      %s58 = sphi 0, %s57
      %s72 = sphi 0, %s58
      %s76 = sphi 0, %s76
      %s78 = sphi 0, %s76
      %s79 = sphi 0, %s78
      %s93 = sphi 0, %s79
      %s97 = sphi 0, %s97
      %s99 = sphi 0, %s97
      %s100 = sphi 0, %s99
      %s114 = sphi 0, %s100
      %s118 = sphi 0, %s118
      %s120 = sphi 0, %s118
      %s121 = sphi 0, %s120
      %s135 = sphi 0, %s121
      %s139 = sphi 0, %s139
      %s141 = sphi 0, %s139
      %s142 = sphi 0, %s141
      %s156 = sphi 0, %s142
      %s160 = sphi 0, %s160
      %s162 = sphi 0, %s160
      %s163 = sphi 0, %s162
      %s177 = sphi 0, %s163
      %s183 = sphi 0, %s185
      %s186 = sphi 0, %s183
      %s187 = sphi 0, %s186
      %s203 = sphi 0, %s187
    $region4: #{tpu_custom_call.1} parent=1 // loop_header_branch
      %24 = sbr.rel (%p22) target = $region8
    $region5: #{tpu_custom_call.1} parent=1 // loop_body
      %s26 = ssub.s32 %s21, 1
      %s27 = ssub.s32 %s21, 2
      %s28 = sadd.s32 %s21, 1
      %s29 = ssub.s32 %s21, %s28
      %p30 = scmp.eq.s32.totalorder %s29, 0
      %s32 = sadd.s32 %s31, 1
      %s33 = scalar_select %p30, %s31, %s32
      %p36 = pneg %p30
      %p37 = scmp.eq.s32.totalorder %s21, 1
      %p38 = por %p36, %p37
      %p39 = scmp.ne.s32.totalorder %s31, %s34
      %p40 = scmp.eq.s32.totalorder %s21, 0
      %p41 = por %p39, %p40
      %p42 = scmp.ne.s32.totalorder %s31, %s34
      %p43 = scmp.eq.s32.totalorder %s26, 1
      %p44 = por %p42, %p43
      %p45 = scmp.ne.s32.totalorder %s34, %s35
      %p46 = scmp.eq.s32.totalorder %s26, 0
      %p47 = por %p45, %p46
      %p48 = scmp.ne.s32.totalorder %s34, %s35
      %p49 = scmp.eq.s32.totalorder %s27, 1
      %p50 = por %p48, %p49
      %p52 = scmp.ne.s32.totalorder %s35, %s51
      %p53 = scmp.eq.s32.totalorder %s27, 0
      %p54 = por %p52, %p53
      %s56 = sadd.s32 %s55, 1
      %p59 = scmp.eq.s32.totalorder %s21, 1
      %p60 = scmp.ne.s32.totalorder %s55, %s57
      %p61 = scmp.eq.s32.totalorder %s21, 0
      %p62 = por %p60, %p61
      %p63 = scmp.ne.s32.totalorder %s55, %s57
      %p64 = scmp.eq.s32.totalorder %s26, 1
      %p65 = por %p63, %p64
      %p66 = scmp.ne.s32.totalorder %s57, %s58
      %p67 = scmp.eq.s32.totalorder %s26, 0
      %p68 = por %p66, %p67
      %p69 = scmp.ne.s32.totalorder %s57, %s58
      %p70 = scmp.eq.s32.totalorder %s27, 1
      %p71 = por %p69, %p70
      %p73 = scmp.ne.s32.totalorder %s58, %s72
      %p74 = scmp.eq.s32.totalorder %s27, 0
      %p75 = por %p73, %p74
      %s77 = sadd.s32 %s76, 1
      %p80 = scmp.eq.s32.totalorder %s21, 1
      %p81 = scmp.ne.s32.totalorder %s76, %s78
      %p82 = scmp.eq.s32.totalorder %s21, 0
      %p83 = por %p81, %p82
      %p84 = scmp.ne.s32.totalorder %s76, %s78
      %p85 = scmp.eq.s32.totalorder %s26, 1
      %p86 = por %p84, %p85
      %p87 = scmp.ne.s32.totalorder %s78, %s79
      %p88 = scmp.eq.s32.totalorder %s26, 0
      %p89 = por %p87, %p88
      %p90 = scmp.ne.s32.totalorder %s78, %s79
      %p91 = scmp.eq.s32.totalorder %s27, 1
      %p92 = por %p90, %p91
      %p94 = scmp.ne.s32.totalorder %s79, %s93
      %p95 = scmp.eq.s32.totalorder %s27, 0
      %p96 = por %p94, %p95
      %s98 = sadd.s32 %s97, 1
      %p101 = scmp.eq.s32.totalorder %s21, 1
      %p102 = scmp.ne.s32.totalorder %s97, %s99
      %p103 = scmp.eq.s32.totalorder %s21, 0
      %p104 = por %p102, %p103
      %p105 = scmp.ne.s32.totalorder %s97, %s99
      %p106 = scmp.eq.s32.totalorder %s26, 1
      %p107 = por %p105, %p106
      %p108 = scmp.ne.s32.totalorder %s99, %s100
      %p109 = scmp.eq.s32.totalorder %s26, 0
      %p110 = por %p108, %p109
      %p111 = scmp.ne.s32.totalorder %s99, %s100
      %p112 = scmp.eq.s32.totalorder %s27, 1
      %p113 = por %p111, %p112
      %p115 = scmp.ne.s32.totalorder %s100, %s114
      %p116 = scmp.eq.s32.totalorder %s27, 0
      %p117 = por %p115, %p116
      %s119 = sadd.s32 %s118, 1
      %p122 = scmp.eq.s32.totalorder %s21, 1
      %p123 = scmp.ne.s32.totalorder %s118, %s120
      %p124 = scmp.eq.s32.totalorder %s21, 0
      %p125 = por %p123, %p124
      %p126 = scmp.ne.s32.totalorder %s118, %s120
      %p127 = scmp.eq.s32.totalorder %s26, 1
      %p128 = por %p126, %p127
      %p129 = scmp.ne.s32.totalorder %s120, %s121
      %p130 = scmp.eq.s32.totalorder %s26, 0
      %p131 = por %p129, %p130
      %p132 = scmp.ne.s32.totalorder %s120, %s121
      %p133 = scmp.eq.s32.totalorder %s27, 1
      %p134 = por %p132, %p133
      %p136 = scmp.ne.s32.totalorder %s121, %s135
      %p137 = scmp.eq.s32.totalorder %s27, 0
      %p138 = por %p136, %p137
      %s140 = sadd.s32 %s139, 1
      %p143 = scmp.eq.s32.totalorder %s21, 1
      %p144 = scmp.ne.s32.totalorder %s139, %s141
      %p145 = scmp.eq.s32.totalorder %s21, 0
      %p146 = por %p144, %p145
      %p147 = scmp.ne.s32.totalorder %s139, %s141
      %p148 = scmp.eq.s32.totalorder %s26, 1
      %p149 = por %p147, %p148
      %p150 = scmp.ne.s32.totalorder %s141, %s142
      %p151 = scmp.eq.s32.totalorder %s26, 0
      %p152 = por %p150, %p151
      %p153 = scmp.ne.s32.totalorder %s141, %s142
      %p154 = scmp.eq.s32.totalorder %s27, 1
      %p155 = por %p153, %p154
      %p157 = scmp.ne.s32.totalorder %s142, %s156
      %p158 = scmp.eq.s32.totalorder %s27, 0
      %p159 = por %p157, %p158
      %s161 = sadd.s32 %s160, 1
      %p164 = scmp.eq.s32.totalorder %s21, 1
      %p165 = scmp.ne.s32.totalorder %s160, %s162
      %p166 = scmp.eq.s32.totalorder %s21, 0
      %p167 = por %p165, %p166
      %p168 = scmp.ne.s32.totalorder %s160, %s162
      %p169 = scmp.eq.s32.totalorder %s26, 1
      %p170 = por %p168, %p169
      %p171 = scmp.ne.s32.totalorder %s162, %s163
      %p172 = scmp.eq.s32.totalorder %s26, 0
      %p173 = por %p171, %p172
      %p174 = scmp.ne.s32.totalorder %s162, %s163
      %p175 = scmp.eq.s32.totalorder %s27, 1
      %p176 = por %p174, %p175
      %p178 = scmp.ne.s32.totalorder %s163, %s177
      %p179 = scmp.eq.s32.totalorder %s27, 0
      %p180 = por %p178, %p179
      %s181 = ssub.s32 %s21, %s28
      %p182 = scmp.eq.s32.totalorder %s181, 0
      %s184 = sadd.s32 %s183, 1
      %s185 = scalar_select %p182, %s183, %s184
      %p188 = pneg %p182
      %p189 = scmp.eq.s32.totalorder %s21, 1
      %p190 = por %p188, %p189
      %p191 = scmp.ne.s32.totalorder %s183, %s186
      %p192 = scmp.eq.s32.totalorder %s21, 0
      %p193 = por %p191, %p192
      %p194 = scmp.ne.s32.totalorder %s183, %s186
      %p195 = scmp.eq.s32.totalorder %s26, 1
      %p196 = por %p194, %p195
      %p197 = scmp.ne.s32.totalorder %s186, %s187
      %p198 = scmp.eq.s32.totalorder %s26, 0
      %p199 = por %p197, %p198
      %p200 = scmp.ne.s32.totalorder %s186, %s187
      %p201 = scmp.eq.s32.totalorder %s27, 1
      %p202 = por %p200, %p201
      %p204 = scmp.ne.s32.totalorder %s187, %s203
      %p205 = scmp.eq.s32.totalorder %s27, 0
      %p206 = por %p204, %p205
      %p207 = scmp.le.s32.totalorder 1, %s21
      %p208 = scmp.lt.s32.totalorder %s21, 3
      %p209 = pnand %p207, %p208
      %p210 = pneg %p209
      // Predicated region
      $region9: #{tpu_custom_call.1} parent=5 // pred_check
        _
      $region10: #{tpu_custom_call.1} parent=5 // pred_check_branch
        %212 = sbr.rel (%p209) target = $region12
      $region11: #{tpu_custom_call.1} parent=5 // pred_region
        %s213 = ssub.s32 %s21, 1
        // Predicated region
        $region13: #{tpu_custom_call.1} parent=11 // pred_check
          %p214 = pneg %p68
        $region14: #{tpu_custom_call.1} parent=11 // pred_check_branch
          %216 = sbr.rel (%p214) target = $region16
        $region15: #{tpu_custom_call.1} parent=11 // pred_region
          _
        $region16: #{tpu_custom_call.1} parent=11 // pred_fallthru
          _
        // Predicated region
        $region17: #{tpu_custom_call.1} parent=11 // pred_check
          %p217 = pneg %p89
        $region18: #{tpu_custom_call.1} parent=11 // pred_check_branch
          %219 = sbr.rel (%p217) target = $region20
        $region19: #{tpu_custom_call.1} parent=11 // pred_region
          _
        $region20: #{tpu_custom_call.1} parent=11 // pred_fallthru
          _
        // Predicated region
        $region21: #{tpu_custom_call.1} parent=11 // pred_check
          %p220 = pneg %p110
        $region22: #{tpu_custom_call.1} parent=11 // pred_check_branch
          %222 = sbr.rel (%p220) target = $region24
        $region23: #{tpu_custom_call.1} parent=11 // pred_region
          _
        $region24: #{tpu_custom_call.1} parent=11 // pred_fallthru
          _
        // Predicated region
        $region25: #{tpu_custom_call.1} parent=11 // pred_check
          %p223 = pneg %p131
        $region26: #{tpu_custom_call.1} parent=11 // pred_check_branch
          %225 = sbr.rel (%p223) target = $region28
        $region27: #{tpu_custom_call.1} parent=11 // pred_region
          _
        $region28: #{tpu_custom_call.1} parent=11 // pred_fallthru
          _
        // Predicated region
        $region29: #{tpu_custom_call.1} parent=11 // pred_check
          %p226 = pneg %p152
        $region30: #{tpu_custom_call.1} parent=11 // pred_check_branch
          %228 = sbr.rel (%p226) target = $region32
        $region31: #{tpu_custom_call.1} parent=11 // pred_region
          %s230 = ssub.s32 16384, 16384
          %231 = vsyncadd [#allocation7], %s230
          %s232 = sshll.u32 [#allocation6], 4
          %s233 = int_to_ptr.vmem [resolvable:$true] %s232
          %238 = dma.hbm_to_vmem [thread:$0]  %s5, 16384, %s233, [#allocation7], 256, 256, 16
        $region32: #{tpu_custom_call.1} parent=11 // pred_fallthru
          _
        // Predicated region
        $region33: #{tpu_custom_call.1} parent=11 // pred_check
          %p239 = pneg %p173
        $region34: #{tpu_custom_call.1} parent=11 // pred_check_branch
          %241 = sbr.rel (%p239) target = $region36
        $region35: #{tpu_custom_call.1} parent=11 // pred_region
          _
        $region36: #{tpu_custom_call.1} parent=11 // pred_fallthru
          _
      $region12: #{tpu_custom_call.1} parent=5 // pred_fallthru
        _
      %p242 = scmp.lt.s32.totalorder %s21, 2
      // Predicated region
      $region37: #{tpu_custom_call.1} parent=5 // pred_check
        %p243 = pneg %p242
      $region38: #{tpu_custom_call.1} parent=5 // pred_check_branch
        %245 = sbr.rel (%p243) target = $region40
      $region39: #{tpu_custom_call.1} parent=5 // pred_region
        // Predicated region
        $region41: #{tpu_custom_call.1} parent=39 // pred_check
          %p246 = pneg %p41
        $region42: #{tpu_custom_call.1} parent=39 // pred_check_branch
          %248 = sbr.rel (%p246) target = $region44
        $region43: #{tpu_custom_call.1} parent=39 // pred_region
          %s249 = sand.u32 %s31, 1
          %s250 = scalar_lea.sflag [#allocation4], %s249
          %s251 = sand.u32 %s31, 1
          %s252 = smul.addr %s251, 64
          %s253 = scalar_lea.vmem [#allocation3], %s252
          %s255 = ssub.s32 1024, 1024
          %256 = vsyncadd %s250, %s255
          %s257 = smul.addr %s21, 8
          %s258 = smul.addr %s257, 128
          %s259 = scalar_lea.hbm %s0, %s258
          %s260 = sshll.u32 %s253, 4
          %s261 = int_to_ptr.vmem [resolvable:$true] %s260
          %266 = dma.hbm_to_vmem [thread:$0]  %s259, 1024, %s261, %s250, 256, 256, 16
        $region44: #{tpu_custom_call.1} parent=39 // pred_fallthru
          _
      $region40: #{tpu_custom_call.1} parent=5 // pred_fallthru
        _
      %p267 = scmp.le.s32.totalorder 1, %s21
      %p268 = scmp.lt.s32.totalorder %s21, 3
      %p269 = pnand %p267, %p268
      %p270 = pneg %p269
      // Predicated region
      $region45: #{tpu_custom_call.1} parent=5 // pred_check
        _
      $region46: #{tpu_custom_call.1} parent=5 // pred_check_branch
        %272 = sbr.rel (%p269) target = $region48
      $region47: #{tpu_custom_call.1} parent=5 // pred_region
        %s273 = ssub.s32 %s21, 1
        %s274 = sand.u32 %s34, 1
        %s275 = scalar_lea.sflag [#allocation4], %s274
        %s276 = sand.u32 %s34, 1
        %s277 = smul.addr %s276, 64
        %s278 = scalar_lea.vmem [#allocation3], %s277
        // Predicated region
        $region49: #{tpu_custom_call.1} parent=47 // pred_check
          %p279 = pneg %p47
        $region50: #{tpu_custom_call.1} parent=47 // pred_check_branch
          %281 = sbr.rel (%p279) target = $region52
        $region51: #{tpu_custom_call.1} parent=47 // pred_region
          %282 = dma.done %s275, 1024
        $region52: #{tpu_custom_call.1} parent=47 // pred_fallthru
          _
        // Predicated region
        $region53: #{tpu_custom_call.1} parent=47 // pred_check
          %p283 = pneg %p152
        $region54: #{tpu_custom_call.1} parent=47 // pred_check_branch
          %285 = sbr.rel (%p283) target = $region56
        $region55: #{tpu_custom_call.1} parent=47 // pred_region
          %286 = dma.done [#allocation7], 16384
        $region56: #{tpu_custom_call.1} parent=47 // pred_fallthru
          _
        %s287 = sand.u32 %s34, 1
        %s288 = scalar_lea.sflag [#allocation4], %s287
        %s289 = sand.u32 %s34, 1
        %s290 = smul.addr %s289, 64
        %s291 = scalar_lea.vmem [#allocation3], %s290
        %p292 = pneg %p47
        %p293 = pneg %p44
        %p294 = pneg %p68
        %p295 = pneg %p65
        %p296 = pneg %p89
        %p297 = pneg %p86
        %p298 = pneg %p110
        %p299 = pneg %p107
        %p300 = pneg %p131
        %p301 = pneg %p128
        %p302 = pneg %p152
        %p303 = pneg %p149
        %p304 = pneg %p173
        %p305 = pneg %p170
        %p306 = pneg %p199
        %p307 = pneg %p196
        %s308 = sand.u32 %s186, 1
        %s309 = scalar_lea.sflag [#allocation5], %s308
        %s310 = sand.u32 %s186, 1
        %s311 = smul.addr %s310, 64
        %s312 = scalar_lea.vmem [#allocation8], %s311
        %v313 = vld [vmem:[%s278] sm:$0xff]
        %v314 = vld [vmem:[%s278 + $0x8] sm:$0xff]
        %v315 = vld [vmem:[%s278 + $0x10] sm:$0xff]
        %v316 = vld [vmem:[%s278 + $0x18] sm:$0xff]
        %v317 = vld [vmem:[%s278 + $0x20] sm:$0xff]
        %v318 = vld [vmem:[%s278 + $0x28] sm:$0xff]
        %v319 = vld [vmem:[%s278 + $0x30] sm:$0xff]
        %v320 = vld [vmem:[%s278 + $0x38] sm:$0xff]
        %v321 = vadd.f32 %v313, %v314
        %322 = vadd.xlane.f32.xlu0 %v321
        %v323 = vpop.xlane.xlu0 %322
        %v324 = vadd.f32 %v315, %v316
        %325 = vadd.xlane.f32.xlu0 %v324
        %v326 = vpop.xlane.xlu0 %325
        %v327 = vadd.f32 %v317, %v318
        %328 = vadd.xlane.f32.xlu0 %v327
        %v329 = vpop.xlane.xlu0 %328
        %v330 = vadd.f32 %v319, %v320
        %331 = vadd.xlane.f32.xlu0 %v330
        %v332 = vpop.xlane.xlu0 %331
        %v333 = vmul.f32 %v323, 0.00390625
        %v334 = vmul.f32 %v326, 0.00390625
        %v335 = vmul.f32 %v329, 0.00390625
        %v336 = vmul.f32 %v332, 0.00390625
        %v337 = vmax.f32 %v313, %v314
        %338 = vmax.xlane.f32.xlu0 %v337
        %v339 = vpop.xlane.xlu0 %338
        %v340 = vmax.f32 %v315, %v316
        %341 = vmax.xlane.f32.xlu0 %v340
        %v342 = vpop.xlane.xlu0 %341
        %v343 = vmax.f32 %v317, %v318
        %344 = vmax.xlane.f32.xlu0 %v343
        %v345 = vpop.xlane.xlu0 %344
        %v346 = vmax.f32 %v319, %v320
        %347 = vmax.xlane.f32.xlu0 %v346
        %v348 = vpop.xlane.xlu0 %347
        %v349 = vld [vmem:[%s1] sm:$0xff]
        %v350 = vld [vmem:[%s1 + $0x8] sm:$0xff]
        %v351 = vld [vmem:[%s1 + $0x10] sm:$0xff]
        %v352 = vld [vmem:[%s1 + $0x18] sm:$0xff]
        %v353 = vld [vmem:[%s2] sm:$0x1]
        %v358 = vlaneseq
        %v359 = vand.u32 %v358, 127
        %v360 = vlaneseq
        %v361 = vshrl.u32 %v360, 7
        %v362 = vsub.s32 %v359, %v361
        %v363 = vrot.slane %v333, %v362
        %v364 = vadd.s32 %v359, 4294967288
        %v365 = vlaneseq
        %v366 = vshrl.u32 %v365, 7
        %v367 = vsub.s32 %v364, %v366
        %v368 = vrot.slane %v334, %v367
        %vm369 = vcmask 130112
        %v370 = vsel %vm369, %v368, %v363
        %v371 = vadd.s32 %v359, 4294967280
        %v372 = vlaneseq
        %v373 = vshrl.u32 %v372, 7
        %v374 = vsub.s32 %v371, %v373
        %v375 = vrot.slane %v335, %v374
        %vm376 = vcmask 195712
        %v377 = vsel %vm376, %v375, %v370
        %v378 = vadd.s32 %v359, 4294967272
        %v379 = vlaneseq
        %v380 = vshrl.u32 %v379, 7
        %v381 = vsub.s32 %v378, %v380
        %v382 = vrot.slane %v336, %v381
        %vm383 = vcmask 261312
        %v384 = vsel %vm383, %v382, %v377
        %vm385 = vcmask 261120
        %v386 = vsel %vm385, %v384, 0
        %388 = vmatprep.subr.mxu0 0.0
        %389 = vmatpush1.msra.mxu0 %v349
        %390 = vmatprep.subr.mxu0 0.0
        %391 = vmatpush1.msra.mxu0 %v350
        %392 = vmatprep.subr.mxu0 0.0
        %393 = vmatpush1.msra.mxu0 %v351
        %394 = vmatprep.subr.mxu0 0.0
        %395 = vmatpush1.msra.mxu0 %v352
        %396 = vmatprep.subr.mxu0 0.0
        %397 = vmatpush1.msra.mxu0 0.0
        %398 = vmatprep.subr.mxu0 0.0
        %399 = vmatpush1.msra.mxu0 0.0
        %400 = vmatprep.subr.mxu0 0.0
        %401 = vmatpush1.msra.mxu0 0.0
        %402 = vmatprep.subr.mxu0 0.0
        %403 = vmatpush1.msra.mxu0 0.0
        %404 = vmatprep.subr.mxu0 0.0
        %405 = vmatpush1.msra.mxu0 0.0
        %406 = vmatprep.subr.mxu0 0.0
        %407 = vmatpush1.msra.mxu0 0.0
        %408 = vmatprep.subr.mxu0 0.0
        %409 = vmatpush1.msra.mxu0 0.0
        %410 = vmatprep.subr.mxu0 0.0
        %411 = vmatpush1.msra.mxu0 0.0
        %412 = vmatprep.subr.mxu0 0.0
        %413 = vmatpush1.msra.mxu0 0.0
        %414 = vmatprep.subr.mxu0 0.0
        %415 = vmatpush1.msra.mxu0 0.0
        %416 = vmatprep.subr.mxu0 0.0
        %417 = vmatpush1.msra.mxu0 0.0
        %418 = vmatprep.subr.mxu0 0.0
        %419 = vmatpush1.msra.mxu0 0.0
        %420 = vmatprep.subr.mxu0 0.0
        %421 = vmatpush1.msra.mxu0 0.0
        %422 = vmatprep.subr.mxu0 0.0
        %423 = vmatpush1.msra.mxu0 0.0
        %424 = vmatprep.subr.mxu0 0.0
        %425 = vmatpush1.msra.mxu0 0.0
        %426 = vmatprep.subr.mxu0 0.0
        %427 = vmatpush1.msra.mxu0 0.0
        %428 = vmatprep.subr.mxu0 0.0
        %429 = vmatpush1.msra.mxu0 0.0
        %430 = vmatprep.subr.mxu0 0.0
        %431 = vmatpush1.msra.mxu0 0.0
        %432 = vmatprep.subr.mxu0 0.0
        %433 = vmatpush1.msra.mxu0 0.0
        %434 = vmatprep.subr.mxu0 0.0
        %435 = vmatpush1.msra.mxu0 0.0
        %436 = vmatprep.subr.mxu0 0.0
        %437 = vmatpush1.msra.mxu0 0.0
        %438 = vmatprep.subr.mxu0 0.0
        %439 = vmatpush1.msra.mxu0 0.0
        %440 = vmatprep.subr.mxu0 0.0
        %441 = vmatpush1.msra.mxu0 0.0
        %442 = vmatprep.subr.mxu0 0.0
        %443 = vmatpush1.msra.mxu0 0.0
        %444 = vmatprep.subr.mxu0 0.0
        %445 = vmatpush1.msra.mxu0 0.0
        %446 = vmatprep.subr.mxu0 0.0
        %447 = vmatpush1.msra.mxu0 0.0
        %448 = vmatprep.subr.mxu0 0.0
        %449 = vmatpush1.msra.mxu0 0.0
        %450 = vmatprep.subr.mxu0 0.0
        %451 = vmatpush1.msra.mxu0 0.0
        %452 = vmatprep.mubr.f32.mxu0 0.0
        %453 = vmatmul.mubr.f32.gmra.mrb[0].mxu0 %v386
        %v454 = vpop.f32.mrb[0].mxu0
        %v455 = vadd.f32 %v353, %v454
        %v456 = vpop.f32.mrb[0].mxu0
        %457 = vdwg.mxu0
        %v458 = vmax.f32 %v455, 0.0
        %v463 = vlaneseq
        %v464 = vshrl.u32 %v463, 7
        %v465 = vsub.s32 %v359, %v464
        %v466 = vrot.slane %v339, %v465
        %v467 = vlaneseq
        %v468 = vshrl.u32 %v467, 7
        %v469 = vsub.s32 %v364, %v468
        %v470 = vrot.slane %v342, %v469
        %v471 = vsel %vm369, %v470, %v466
        %v472 = vlaneseq
        %v473 = vshrl.u32 %v472, 7
        %v474 = vsub.s32 %v371, %v473
        %v475 = vrot.slane %v345, %v474
        %v476 = vsel %vm376, %v475, %v471
        %v477 = vlaneseq
        %v478 = vshrl.u32 %v477, 7
        %v479 = vsub.s32 %v378, %v478
        %v480 = vrot.slane %v348, %v479
        %v481 = vsel %vm383, %v480, %v476
        %v482 = vsel %vm385, %v481, 0
        %484 = vmatprep.subr.mxu0 0.0
        %485 = vmatpush1.msra.mxu0 %v349
        %486 = vmatprep.subr.mxu0 0.0
        %487 = vmatpush1.msra.mxu0 %v350
        %488 = vmatprep.subr.mxu0 0.0
        %489 = vmatpush1.msra.mxu0 %v351
        %490 = vmatprep.subr.mxu0 0.0
        %491 = vmatpush1.msra.mxu0 %v352
        %492 = vmatprep.subr.mxu0 0.0
        %493 = vmatpush1.msra.mxu0 0.0
        %494 = vmatprep.subr.mxu0 0.0
        %495 = vmatpush1.msra.mxu0 0.0
        %496 = vmatprep.subr.mxu0 0.0
        %497 = vmatpush1.msra.mxu0 0.0
        %498 = vmatprep.subr.mxu0 0.0
        %499 = vmatpush1.msra.mxu0 0.0
        %500 = vmatprep.subr.mxu0 0.0
        %501 = vmatpush1.msra.mxu0 0.0
        %502 = vmatprep.subr.mxu0 0.0
        %503 = vmatpush1.msra.mxu0 0.0
        %504 = vmatprep.subr.mxu0 0.0
        %505 = vmatpush1.msra.mxu0 0.0
        %506 = vmatprep.subr.mxu0 0.0
        %507 = vmatpush1.msra.mxu0 0.0
        %508 = vmatprep.subr.mxu0 0.0
        %509 = vmatpush1.msra.mxu0 0.0
        %510 = vmatprep.subr.mxu0 0.0
        %511 = vmatpush1.msra.mxu0 0.0
        %512 = vmatprep.subr.mxu0 0.0
        %513 = vmatpush1.msra.mxu0 0.0
        %514 = vmatprep.subr.mxu0 0.0
        %515 = vmatpush1.msra.mxu0 0.0
        %516 = vmatprep.subr.mxu0 0.0
        %517 = vmatpush1.msra.mxu0 0.0
        %518 = vmatprep.subr.mxu0 0.0
        %519 = vmatpush1.msra.mxu0 0.0
        %520 = vmatprep.subr.mxu0 0.0
        %521 = vmatpush1.msra.mxu0 0.0
        %522 = vmatprep.subr.mxu0 0.0
        %523 = vmatpush1.msra.mxu0 0.0
        %524 = vmatprep.subr.mxu0 0.0
        %525 = vmatpush1.msra.mxu0 0.0
        %526 = vmatprep.subr.mxu0 0.0
        %527 = vmatpush1.msra.mxu0 0.0
        %528 = vmatprep.subr.mxu0 0.0
        %529 = vmatpush1.msra.mxu0 0.0
        %530 = vmatprep.subr.mxu0 0.0
        %531 = vmatpush1.msra.mxu0 0.0
        %532 = vmatprep.subr.mxu0 0.0
        %533 = vmatpush1.msra.mxu0 0.0
        %534 = vmatprep.subr.mxu0 0.0
        %535 = vmatpush1.msra.mxu0 0.0
        %536 = vmatprep.subr.mxu0 0.0
        %537 = vmatpush1.msra.mxu0 0.0
        %538 = vmatprep.subr.mxu0 0.0
        %539 = vmatpush1.msra.mxu0 0.0
        %540 = vmatprep.subr.mxu0 0.0
        %541 = vmatpush1.msra.mxu0 0.0
        %542 = vmatprep.subr.mxu0 0.0
        %543 = vmatpush1.msra.mxu0 0.0
        %544 = vmatprep.subr.mxu0 0.0
        %545 = vmatpush1.msra.mxu0 0.0
        %546 = vmatprep.subr.mxu0 0.0
        %547 = vmatpush1.msra.mxu0 0.0
        %548 = vmatprep.mubr.f32.mxu0 0.0
        %549 = vmatmul.mubr.f32.gmra.mrb[0].mxu0 %v482
        %v550 = vpop.f32.mrb[0].mxu0
        %v551 = vadd.f32 %v353, %v550
        %v552 = vpop.f32.mrb[0].mxu0
        %553 = vdwg.mxu0
        %v554 = vmax.f32 %v551, 0.0
        %v555 = vadd.f32 %v458, %v554
        %v556 = vld [vmem:[%s3] sm:$0x3]
        %v557 = vld [vmem:[%s4] sm:$0x1]
        %v558 = vmul.f32 %v557, 2.0
        %vm559 = vcmask 15360
        %v561 = vsel %vm559, %v555, 0
        %vm563 = vcmask 1041408
        %v565 = vsel %vm563, %v556, 0
        %567 = vmatprep.subr.mxu0 0.0
        %568 = vmatpush1.msra.mxu0 %v565
        %569 = vmatprep.subr.mxu0 0.0
        %570 = vmatpush1.msra.mxu0 0.0
        %571 = vmatprep.subr.mxu0 0.0
        %572 = vmatpush1.msra.mxu0 0.0
        %573 = vmatprep.subr.mxu0 0.0
        %574 = vmatpush1.msra.mxu0 0.0
        %575 = vmatprep.subr.mxu0 0.0
        %576 = vmatpush1.msra.mxu0 0.0
        %577 = vmatprep.subr.mxu0 0.0
        %578 = vmatpush1.msra.mxu0 0.0
        %579 = vmatprep.subr.mxu0 0.0
        %580 = vmatpush1.msra.mxu0 0.0
        %581 = vmatprep.subr.mxu0 0.0
        %582 = vmatpush1.msra.mxu0 0.0
        %583 = vmatprep.subr.mxu0 0.0
        %584 = vmatpush1.msra.mxu0 0.0
        %585 = vmatprep.subr.mxu0 0.0
        %586 = vmatpush1.msra.mxu0 0.0
        %587 = vmatprep.subr.mxu0 0.0
        %588 = vmatpush1.msra.mxu0 0.0
        %589 = vmatprep.subr.mxu0 0.0
        %590 = vmatpush1.msra.mxu0 0.0
        %591 = vmatprep.subr.mxu0 0.0
        %592 = vmatpush1.msra.mxu0 0.0
        %593 = vmatprep.subr.mxu0 0.0
        %594 = vmatpush1.msra.mxu0 0.0
        %595 = vmatprep.subr.mxu0 0.0
        %596 = vmatpush1.msra.mxu0 0.0
        %597 = vmatprep.subr.mxu0 0.0
        %598 = vmatpush1.msra.mxu0 0.0
        %599 = vmatprep.subr.mxu0 0.0
        %600 = vmatpush1.msra.mxu0 0.0
        %601 = vmatprep.subr.mxu0 0.0
        %602 = vmatpush1.msra.mxu0 0.0
        %603 = vmatprep.subr.mxu0 0.0
        %604 = vmatpush1.msra.mxu0 0.0
        %605 = vmatprep.subr.mxu0 0.0
        %606 = vmatpush1.msra.mxu0 0.0
        %607 = vmatprep.subr.mxu0 0.0
        %608 = vmatpush1.msra.mxu0 0.0
        %609 = vmatprep.subr.mxu0 0.0
        %610 = vmatpush1.msra.mxu0 0.0
        %611 = vmatprep.subr.mxu0 0.0
        %612 = vmatpush1.msra.mxu0 0.0
        %613 = vmatprep.subr.mxu0 0.0
        %614 = vmatpush1.msra.mxu0 0.0
        %615 = vmatprep.subr.mxu0 0.0
        %616 = vmatpush1.msra.mxu0 0.0
        %617 = vmatprep.subr.mxu0 0.0
        %618 = vmatpush1.msra.mxu0 0.0
        %619 = vmatprep.subr.mxu0 0.0
        %620 = vmatpush1.msra.mxu0 0.0
        %621 = vmatprep.subr.mxu0 0.0
        %622 = vmatpush1.msra.mxu0 0.0
        %623 = vmatprep.subr.mxu0 0.0
        %624 = vmatpush1.msra.mxu0 0.0
        %625 = vmatprep.subr.mxu0 0.0
        %626 = vmatpush1.msra.mxu0 0.0
        %627 = vmatprep.subr.mxu0 0.0
        %628 = vmatpush1.msra.mxu0 0.0
        %629 = vmatprep.subr.mxu0 0.0
        %630 = vmatpush1.msra.mxu0 0.0
        %631 = vmatprep.mubr.f32.mxu0 0.0
        %632 = vmatmul.mubr.f32.gmra.mrb[0].mxu0 %v561
        %v633 = vpop.f32.mrb[0].mxu0
        %v634 = vadd.f32 %v558, %v633
        %v635 = vpop.f32.mrb[0].mxu0
        %636 = vdwg.mxu0
        %v637 = vxor.u32 %v634, 2147483648
        %v638 = vmul.f32 %v637, 1.442695
        %v639 = vpow.pop %v638
        %v640 = vadd.f32 %v639, 1.0
        %v641 = vrcp.pop %v640
        %v642 = vmul.f32 1.0, %v641
        %v643 = vlaneseq
        %v644 = vshrl.u32 %v643, 7
        %v645 = vsub.s32 0, %v644
        %v646 = vrot.slane %v642, %v645
        %648 = vbcast.lane.b32.xlu0 %v646, 256
        %v649 = vpop.permute.xlu0 %648
        %s651 = sor.u32 256, 8
        %652 = vbcast.lane.b32.xlu0 %v646, %s651
        %v653 = vpop.permute.xlu0 %652
        %s655 = sor.u32 256, 16
        %656 = vbcast.lane.b32.xlu0 %v646, %s655
        %v657 = vpop.permute.xlu0 %656
        %s659 = sor.u32 256, 24
        %660 = vbcast.lane.b32.xlu0 %v646, %s659
        %v661 = vpop.permute.xlu0 %660
        %v662 = vmul.f32 %v313, %v649
        %v663 = vmul.f32 %v314, %v649
        %v664 = vmul.f32 %v315, %v653
        %v665 = vmul.f32 %v316, %v653
        %v666 = vmul.f32 %v317, %v657
        %v667 = vmul.f32 %v318, %v657
        %v668 = vmul.f32 %v319, %v661
        %v669 = vmul.f32 %v320, %v661
        %v670 = vadd.f32 %v662, %v664
        %v671 = vadd.f32 %v670, %v666
        %v672 = vadd.f32 %v671, %v668
        %v673 = vrot.slane %v672, 4
        %v674 = vadd.f32 %v672, %v673
        %v675 = vrot.slane %v674, 2
        %v676 = vadd.f32 %v674, %v675
        %v677 = vrot.slane %v676, 1
        %v678 = vadd.f32 %v676, %v677
        %v679 = vadd.f32 %v663, %v665
        %v680 = vadd.f32 %v679, %v667
        %v681 = vadd.f32 %v680, %v669
        %v682 = vrot.slane %v681, 4
        %v683 = vadd.f32 %v681, %v682
        %v684 = vrot.slane %v683, 2
        %v685 = vadd.f32 %v683, %v684
        %v686 = vrot.slane %v685, 1
        %v687 = vadd.f32 %v685, %v686
        %v688 = vmul.f32 %v678, 0.03125
        %v689 = vmul.f32 %v687, 0.03125
        %v690 = vmax.f32 %v662, %v666
        %v691 = vmax.f32 %v664, %v668
        %v692 = vmax.f32 %v690, %v691
        %v693 = vrot.slane %v692, 4
        %v694 = vmax.f32 %v692, %v693
        %v695 = vrot.slane %v694, 2
        %v696 = vmax.f32 %v694, %v695
        %v697 = vrot.slane %v696, 1
        %v698 = vmax.f32 %v696, %v697
        %v699 = vmax.f32 %v663, %v667
        %v700 = vmax.f32 %v665, %v669
        %v701 = vmax.f32 %v699, %v700
        %v702 = vrot.slane %v701, 4
        %v703 = vmax.f32 %v701, %v702
        %v704 = vrot.slane %v703, 2
        %v705 = vmax.f32 %v703, %v704
        %v706 = vrot.slane %v705, 1
        %v707 = vmax.f32 %v705, %v706
        %v708 = vld [vmem:[#allocation6] sm:$0xff]
        %v709 = vld [vmem:[#allocation6 + $0x8] sm:$0xff]
        %v710 = vld [vmem:[#allocation6 + $0x10] sm:$0xff]
        %v711 = vld [vmem:[#allocation6 + $0x18] sm:$0xff]
        %v712 = vld [vmem:[#allocation6 + $0x20] sm:$0xff]
        %v713 = vld [vmem:[#allocation6 + $0x28] sm:$0xff]
        %v714 = vld [vmem:[#allocation6 + $0x30] sm:$0xff]
        %v715 = vld [vmem:[#allocation6 + $0x38] sm:$0xff]
        %v716 = vld [vmem:[#allocation6 + $0x40] sm:$0xff]
        %v717 = vld [vmem:[#allocation6 + $0x48] sm:$0xff]
        %v718 = vld [vmem:[#allocation6 + $0x50] sm:$0xff]
        %v719 = vld [vmem:[#allocation6 + $0x58] sm:$0xff]
        %v720 = vld [vmem:[#allocation6 + $0x60] sm:$0xff]
        %v721 = vld [vmem:[#allocation6 + $0x68] sm:$0xff]
        %v722 = vld [vmem:[#allocation6 + $0x70] sm:$0xff]
        %v723 = vld [vmem:[#allocation6 + $0x78] sm:$0xff]
        %v724 = vld [vmem:[#allocation6 + $0x80] sm:$0xff]
        %v725 = vld [vmem:[#allocation6 + $0x88] sm:$0xff]
        %v726 = vld [vmem:[#allocation6 + $0x90] sm:$0xff]
        %v727 = vld [vmem:[#allocation6 + $0x98] sm:$0xff]
        %v728 = vld [vmem:[#allocation6 + $0xa0] sm:$0xff]
        %v729 = vld [vmem:[#allocation6 + $0xa8] sm:$0xff]
        %v730 = vld [vmem:[#allocation6 + $0xb0] sm:$0xff]
        %v731 = vld [vmem:[#allocation6 + $0xb8] sm:$0xff]
        %v732 = vld [vmem:[#allocation6 + $0xc0] sm:$0xff]
        %v733 = vld [vmem:[#allocation6 + $0xc8] sm:$0xff]
        %v734 = vld [vmem:[#allocation6 + $0xd0] sm:$0xff]
        %v735 = vld [vmem:[#allocation6 + $0xd8] sm:$0xff]
        %v736 = vld [vmem:[#allocation6 + $0xe0] sm:$0xff]
        %v737 = vld [vmem:[#allocation6 + $0xe8] sm:$0xff]
        %v738 = vld [vmem:[#allocation6 + $0xf0] sm:$0xff]
        %v739 = vld [vmem:[#allocation6 + $0xf8] sm:$0xff]
        %v740 = vld [vmem:[#allocation6 + $0x100] sm:$0xff]
        %v741 = vld [vmem:[#allocation6 + $0x108] sm:$0xff]
        %v742 = vld [vmem:[#allocation6 + $0x110] sm:$0xff]
        %v743 = vld [vmem:[#allocation6 + $0x118] sm:$0xff]
        %v744 = vld [vmem:[#allocation6 + $0x120] sm:$0xff]
        %v745 = vld [vmem:[#allocation6 + $0x128] sm:$0xff]
        %v746 = vld [vmem:[#allocation6 + $0x130] sm:$0xff]
        %v747 = vld [vmem:[#allocation6 + $0x138] sm:$0xff]
        %v748 = vld [vmem:[#allocation6 + $0x140] sm:$0xff]
        %v749 = vld [vmem:[#allocation6 + $0x148] sm:$0xff]
        %v750 = vld [vmem:[#allocation6 + $0x150] sm:$0xff]
        %v751 = vld [vmem:[#allocation6 + $0x158] sm:$0xff]
        %v752 = vld [vmem:[#allocation6 + $0x160] sm:$0xff]
        %v753 = vld [vmem:[#allocation6 + $0x168] sm:$0xff]
        %v754 = vld [vmem:[#allocation6 + $0x170] sm:$0xff]
        %v755 = vld [vmem:[#allocation6 + $0x178] sm:$0xff]
        %v756 = vld [vmem:[#allocation6 + $0x180] sm:$0xff]
        %v757 = vld [vmem:[#allocation6 + $0x188] sm:$0xff]
        %v758 = vld [vmem:[#allocation6 + $0x190] sm:$0xff]
        %v759 = vld [vmem:[#allocation6 + $0x198] sm:$0xff]
        %v760 = vld [vmem:[#allocation6 + $0x1a0] sm:$0xff]
        %v761 = vld [vmem:[#allocation6 + $0x1a8] sm:$0xff]
        %v762 = vld [vmem:[#allocation6 + $0x1b0] sm:$0xff]
        %v763 = vld [vmem:[#allocation6 + $0x1b8] sm:$0xff]
        %v764 = vld [vmem:[#allocation6 + $0x1c0] sm:$0xff]
        %v765 = vld [vmem:[#allocation6 + $0x1c8] sm:$0xff]
        %v766 = vld [vmem:[#allocation6 + $0x1d0] sm:$0xff]
        %v767 = vld [vmem:[#allocation6 + $0x1d8] sm:$0xff]
        %v768 = vld [vmem:[#allocation6 + $0x1e0] sm:$0xff]
        %v769 = vld [vmem:[#allocation6 + $0x1e8] sm:$0xff]
        %v770 = vld [vmem:[#allocation6 + $0x1f0] sm:$0xff]
        %v771 = vld [vmem:[#allocation6 + $0x1f8] sm:$0xff]
        %s772 = scalar_lea.vmem [#allocation6], 512
        %v773 = vld [vmem:[%s772] sm:$0xff]
        %v774 = vld [vmem:[%s772 + $0x8] sm:$0xff]
        %v775 = vld [vmem:[%s772 + $0x10] sm:$0xff]
        %v776 = vld [vmem:[%s772 + $0x18] sm:$0xff]
        %v777 = vld [vmem:[%s772 + $0x20] sm:$0xff]
        %v778 = vld [vmem:[%s772 + $0x28] sm:$0xff]
        %v779 = vld [vmem:[%s772 + $0x30] sm:$0xff]
        %v780 = vld [vmem:[%s772 + $0x38] sm:$0xff]
        %v781 = vld [vmem:[%s772 + $0x40] sm:$0xff]
        %v782 = vld [vmem:[%s772 + $0x48] sm:$0xff]
        %v783 = vld [vmem:[%s772 + $0x50] sm:$0xff]
        %v784 = vld [vmem:[%s772 + $0x58] sm:$0xff]
        %v785 = vld [vmem:[%s772 + $0x60] sm:$0xff]
        %v786 = vld [vmem:[%s772 + $0x68] sm:$0xff]
        %v787 = vld [vmem:[%s772 + $0x70] sm:$0xff]
        %v788 = vld [vmem:[%s772 + $0x78] sm:$0xff]
        %v789 = vld [vmem:[%s772 + $0x80] sm:$0xff]
        %v790 = vld [vmem:[%s772 + $0x88] sm:$0xff]
        %v791 = vld [vmem:[%s772 + $0x90] sm:$0xff]
        %v792 = vld [vmem:[%s772 + $0x98] sm:$0xff]
        %v793 = vld [vmem:[%s772 + $0xa0] sm:$0xff]
        %v794 = vld [vmem:[%s772 + $0xa8] sm:$0xff]
        %v795 = vld [vmem:[%s772 + $0xb0] sm:$0xff]
        %v796 = vld [vmem:[%s772 + $0xb8] sm:$0xff]
        %v797 = vld [vmem:[%s772 + $0xc0] sm:$0xff]
        %v798 = vld [vmem:[%s772 + $0xc8] sm:$0xff]
        %v799 = vld [vmem:[%s772 + $0xd0] sm:$0xff]
        %v800 = vld [vmem:[%s772 + $0xd8] sm:$0xff]
        %v801 = vld [vmem:[%s772 + $0xe0] sm:$0xff]
        %v802 = vld [vmem:[%s772 + $0xe8] sm:$0xff]
        %v803 = vld [vmem:[%s772 + $0xf0] sm:$0xff]
        %v804 = vld [vmem:[%s772 + $0xf8] sm:$0xff]
        %v805 = vld [vmem:[%s772 + $0x100] sm:$0xff]
        %v806 = vld [vmem:[%s772 + $0x108] sm:$0xff]
        %v807 = vld [vmem:[%s772 + $0x110] sm:$0xff]
        %v808 = vld [vmem:[%s772 + $0x118] sm:$0xff]
        %v809 = vld [vmem:[%s772 + $0x120] sm:$0xff]
        %v810 = vld [vmem:[%s772 + $0x128] sm:$0xff]
        %v811 = vld [vmem:[%s772 + $0x130] sm:$0xff]
        %v812 = vld [vmem:[%s772 + $0x138] sm:$0xff]
        %v813 = vld [vmem:[%s772 + $0x140] sm:$0xff]
        %v814 = vld [vmem:[%s772 + $0x148] sm:$0xff]
        %v815 = vld [vmem:[%s772 + $0x150] sm:$0xff]
        %v816 = vld [vmem:[%s772 + $0x158] sm:$0xff]
        %v817 = vld [vmem:[%s772 + $0x160] sm:$0xff]
        %v818 = vld [vmem:[%s772 + $0x168] sm:$0xff]
        %v819 = vld [vmem:[%s772 + $0x170] sm:$0xff]
        %v820 = vld [vmem:[%s772 + $0x178] sm:$0xff]
        %v821 = vld [vmem:[%s772 + $0x180] sm:$0xff]
        %v822 = vld [vmem:[%s772 + $0x188] sm:$0xff]
        %v823 = vld [vmem:[%s772 + $0x190] sm:$0xff]
        %v824 = vld [vmem:[%s772 + $0x198] sm:$0xff]
        %v825 = vld [vmem:[%s772 + $0x1a0] sm:$0xff]
        %v826 = vld [vmem:[%s772 + $0x1a8] sm:$0xff]
        %v827 = vld [vmem:[%s772 + $0x1b0] sm:$0xff]
        %v828 = vld [vmem:[%s772 + $0x1b8] sm:$0xff]
        %v829 = vld [vmem:[%s772 + $0x1c0] sm:$0xff]
        %v830 = vld [vmem:[%s772 + $0x1c8] sm:$0xff]
        %v831 = vld [vmem:[%s772 + $0x1d0] sm:$0xff]
        %v832 = vld [vmem:[%s772 + $0x1d8] sm:$0xff]
        %v833 = vld [vmem:[%s772 + $0x1e0] sm:$0xff]
        %v834 = vld [vmem:[%s772 + $0x1e8] sm:$0xff]
        %v835 = vld [vmem:[%s772 + $0x1f0] sm:$0xff]
        %v836 = vld [vmem:[%s772 + $0x1f8] sm:$0xff]
        %837 = vmatprep.subr.mxu0 %v774
        %838 = vmatpush1.msra.mxu0 %v773
        %839 = vmatprep.subr.mxu0 %v776
        %840 = vmatpush1.msra.mxu0 %v775
        %841 = vmatprep.subr.mxu0 %v778
        %842 = vmatpush1.msra.mxu0 %v777
        %843 = vmatprep.subr.mxu0 %v780
        %844 = vmatpush1.msra.mxu0 %v779
        %845 = vmatprep.subr.mxu0 %v782
        %846 = vmatpush1.msra.mxu0 %v781
        %847 = vmatprep.subr.mxu0 %v784
        %848 = vmatpush1.msra.mxu0 %v783
        %849 = vmatprep.subr.mxu0 %v786
        %850 = vmatpush1.msra.mxu0 %v785
        %851 = vmatprep.subr.mxu0 %v788
        %852 = vmatpush1.msra.mxu0 %v787
        %853 = vmatprep.subr.mxu0 %v790
        %854 = vmatpush1.msra.mxu0 %v789
        %855 = vmatprep.subr.mxu0 %v792
        %856 = vmatpush1.msra.mxu0 %v791
        %857 = vmatprep.subr.mxu0 %v794
        %858 = vmatpush1.msra.mxu0 %v793
        %859 = vmatprep.subr.mxu0 %v796
        %860 = vmatpush1.msra.mxu0 %v795
        %861 = vmatprep.subr.mxu0 %v798
        %862 = vmatpush1.msra.mxu0 %v797
        %863 = vmatprep.subr.mxu0 %v800
        %864 = vmatpush1.msra.mxu0 %v799
        %865 = vmatprep.subr.mxu0 %v802
        %866 = vmatpush1.msra.mxu0 %v801
        %867 = vmatprep.subr.mxu0 %v804
        %868 = vmatpush1.msra.mxu0 %v803
        %869 = vmatprep.subr.mxu0 %v806
        %870 = vmatpush1.msra.mxu0 %v805
        %871 = vmatprep.subr.mxu0 %v808
        %872 = vmatpush1.msra.mxu0 %v807
        %873 = vmatprep.subr.mxu0 %v810
        %874 = vmatpush1.msra.mxu0 %v809
        %875 = vmatprep.subr.mxu0 %v812
        %876 = vmatpush1.msra.mxu0 %v811
        %877 = vmatprep.subr.mxu0 %v814
        %878 = vmatpush1.msra.mxu0 %v813
        %879 = vmatprep.subr.mxu0 %v816
        %880 = vmatpush1.msra.mxu0 %v815
        %881 = vmatprep.subr.mxu0 %v818
        %882 = vmatpush1.msra.mxu0 %v817
        %883 = vmatprep.subr.mxu0 %v820
        %884 = vmatpush1.msra.mxu0 %v819
        %885 = vmatprep.subr.mxu0 %v822
        %886 = vmatpush1.msra.mxu0 %v821
        %887 = vmatprep.subr.mxu0 %v824
        %888 = vmatpush1.msra.mxu0 %v823
        %889 = vmatprep.subr.mxu0 %v826
        %890 = vmatpush1.msra.mxu0 %v825
        %891 = vmatprep.subr.mxu0 %v828
        %892 = vmatpush1.msra.mxu0 %v827
        %893 = vmatprep.subr.mxu0 %v830
        %894 = vmatpush1.msra.mxu0 %v829
        %895 = vmatprep.subr.mxu0 %v832
        %896 = vmatpush1.msra.mxu0 %v831
        %897 = vmatprep.subr.mxu0 %v834
        %898 = vmatpush1.msra.mxu0 %v833
        %899 = vmatprep.subr.mxu0 %v836
        %900 = vmatpush1.msra.mxu0 %v835
        %901 = vmatprep.mubr.f32.mxu0 %v707
        %902 = vmatmul.mubr.f32.gmra.mrb[0].mxu0 %v698
        %v903 = vpop.f32.mrb[0].mxu0
        %v904 = vadd.f32 0.0, %v903
        %v905 = vpop.f32.mrb[0].mxu0
        %v906 = vadd.f32 0.0, %v905
        %907 = vdwg.mxu0
        %908 = vmatprep.subr.mxu0 %v709
        %909 = vmatpush1.msra.mxu0 %v708
        %910 = vmatprep.subr.mxu0 %v711
        %911 = vmatpush1.msra.mxu0 %v710
        %912 = vmatprep.subr.mxu0 %v713
        %913 = vmatpush1.msra.mxu0 %v712
        %914 = vmatprep.subr.mxu0 %v715
        %915 = vmatpush1.msra.mxu0 %v714
        %916 = vmatprep.subr.mxu0 %v717
        %917 = vmatpush1.msra.mxu0 %v716
        %918 = vmatprep.subr.mxu0 %v719
        %919 = vmatpush1.msra.mxu0 %v718
        %920 = vmatprep.subr.mxu0 %v721
        %921 = vmatpush1.msra.mxu0 %v720
        %922 = vmatprep.subr.mxu0 %v723
        %923 = vmatpush1.msra.mxu0 %v722
        %924 = vmatprep.subr.mxu0 %v725
        %925 = vmatpush1.msra.mxu0 %v724
        %926 = vmatprep.subr.mxu0 %v727
        %927 = vmatpush1.msra.mxu0 %v726
        %928 = vmatprep.subr.mxu0 %v729
        %929 = vmatpush1.msra.mxu0 %v728
        %930 = vmatprep.subr.mxu0 %v731
        %931 = vmatpush1.msra.mxu0 %v730
        %932 = vmatprep.subr.mxu0 %v733
        %933 = vmatpush1.msra.mxu0 %v732
        %934 = vmatprep.subr.mxu0 %v735
        %935 = vmatpush1.msra.mxu0 %v734
        %936 = vmatprep.subr.mxu0 %v737
        %937 = vmatpush1.msra.mxu0 %v736
        %938 = vmatprep.subr.mxu0 %v739
        %939 = vmatpush1.msra.mxu0 %v738
        %940 = vmatprep.subr.mxu0 %v741
        %941 = vmatpush1.msra.mxu0 %v740
        %942 = vmatprep.subr.mxu0 %v743
        %943 = vmatpush1.msra.mxu0 %v742
        %944 = vmatprep.subr.mxu0 %v745
        %945 = vmatpush1.msra.mxu0 %v744
        %946 = vmatprep.subr.mxu0 %v747
        %947 = vmatpush1.msra.mxu0 %v746
        %948 = vmatprep.subr.mxu0 %v749
        %949 = vmatpush1.msra.mxu0 %v748
        %950 = vmatprep.subr.mxu0 %v751
        %951 = vmatpush1.msra.mxu0 %v750
        %952 = vmatprep.subr.mxu0 %v753
        %953 = vmatpush1.msra.mxu0 %v752
        %954 = vmatprep.subr.mxu0 %v755
        %955 = vmatpush1.msra.mxu0 %v754
        %956 = vmatprep.subr.mxu0 %v757
        %957 = vmatpush1.msra.mxu0 %v756
        %958 = vmatprep.subr.mxu0 %v759
        %959 = vmatpush1.msra.mxu0 %v758
        %960 = vmatprep.subr.mxu0 %v761
        %961 = vmatpush1.msra.mxu0 %v760
        %962 = vmatprep.subr.mxu0 %v763
        %963 = vmatpush1.msra.mxu0 %v762
        %964 = vmatprep.subr.mxu0 %v765
        %965 = vmatpush1.msra.mxu0 %v764
        %966 = vmatprep.subr.mxu0 %v767
        %967 = vmatpush1.msra.mxu0 %v766
        %968 = vmatprep.subr.mxu0 %v769
        %969 = vmatpush1.msra.mxu0 %v768
        %970 = vmatprep.subr.mxu0 %v771
        %971 = vmatpush1.msra.mxu0 %v770
        %972 = vmatprep.mubr.f32.mxu0 %v689
        %973 = vmatmul.mubr.f32.gmra.mrb[0].mxu0 %v688
        %v974 = vpop.f32.mrb[0].mxu0
        %v975 = vadd.f32 %v904, %v974
        %v976 = vpop.f32.mrb[0].mxu0
        %v977 = vadd.f32 %v906, %v976
        %978 = vdwg.mxu0
        %s979 = sld [smem:[#allocation2]]
        %v980 = vstv %s979
        %v981 = vadd.f32 %v975, %v980
        %v982 = vadd.f32 %v977, %v980
        %v983 = vxor.u32 %v981, 2147483648
        %v984 = vxor.u32 %v982, 2147483648
        %v985 = vmul.f32 %v983, 1.442695
        %v986 = vpow.pop %v985
        %v987 = vmul.f32 %v984, 1.442695
        %v988 = vpow.pop %v987
        %v989 = vadd.f32 %v986, 1.0
        %v990 = vadd.f32 %v988, 1.0
        %v991 = vrcp.pop %v989
        %v992 = vmul.f32 1.0, %v991
        %v993 = vrcp.pop %v990
        %v994 = vmul.f32 1.0, %v993
        %v995 = vlaneseq
        %v996 = vshrl.u32 %v995, 7
        %v997 = vsub.s32 0, %v996
        %v998 = vrot.slane %v992, %v997
        %v999 = vlaneseq
        %v1000 = vshrl.u32 %v999, 7
        %v1001 = vsub.s32 0, %v1000
        %v1002 = vrot.slane %v994, %v1001
        %v1003 = vmul.f32 %v662, %v998
        %v1004 = vmul.f32 %v663, %v1002
        %v1005 = vmul.f32 %v664, %v998
        %v1006 = vmul.f32 %v665, %v1002
        %v1007 = vmul.f32 %v666, %v998
        %v1008 = vmul.f32 %v667, %v1002
        %v1009 = vmul.f32 %v668, %v998
        %v1010 = vmul.f32 %v669, %v1002
        %1011 = vst [vmem:[%s312] sm:$0xff] %v1003
        %1012 = vst [vmem:[%s312 + $0x8] sm:$0xff] %v1004
        %1013 = vst [vmem:[%s312 + $0x10] sm:$0xff] %v1005
        %1014 = vst [vmem:[%s312 + $0x18] sm:$0xff] %v1006
        %1015 = vst [vmem:[%s312 + $0x20] sm:$0xff] %v1007
        %1016 = vst [vmem:[%s312 + $0x28] sm:$0xff] %v1008
        %1017 = vst [vmem:[%s312 + $0x30] sm:$0xff] %v1009
        %1018 = vst [vmem:[%s312 + $0x38] sm:$0xff] %v1010
        %s1019 = sand.u32 %s186, 1
        %s1020 = scalar_lea.sflag [#allocation5], %s1019
        %s1021 = sand.u32 %s186, 1
        %s1022 = smul.addr %s1021, 64
        %s1023 = scalar_lea.vmem [#allocation8], %s1022
        // Predicated region
        $region57: #{tpu_custom_call.1} parent=47 // pred_check
          %p1024 = pneg %p196
        $region58: #{tpu_custom_call.1} parent=47 // pred_check_branch
          %1026 = sbr.rel (%p1024) target = $region60
        $region59: #{tpu_custom_call.1} parent=47 // pred_region
          %s1028 = ssub.s32 1024, 1024
          %1029 = vsyncadd %s1020, %s1028
          %s1030 = smul.addr %s26, 8
          %s1031 = smul.addr %s1030, 128
          %s1032 = scalar_lea.hbm %s7, %s1031
          %s1033 = sshll.u32 %s1023, 4
          %s1034 = int_to_ptr.vmem [resolvable:$true] %s1033
          %1039 = dma.vmem_to_hbm [thread:$0]  %s1034, 1024, %s1032, %s1020, 256, 256, 16
        $region60: #{tpu_custom_call.1} parent=47 // pred_fallthru
          _
      $region48: #{tpu_custom_call.1} parent=5 // pred_fallthru
        _
      %p1040 = scmp.le.s32.totalorder 2, %s21
      // Predicated region
      $region61: #{tpu_custom_call.1} parent=5 // pred_check
        %p1041 = pneg %p1040
      $region62: #{tpu_custom_call.1} parent=5 // pred_check_branch
        %1043 = sbr.rel (%p1041) target = $region64
      $region63: #{tpu_custom_call.1} parent=5 // pred_region
        %s1044 = ssub.s32 %s21, 2
        // Predicated region
        $region65: #{tpu_custom_call.1} parent=63 // pred_check
          %p1045 = pneg %p202
        $region66: #{tpu_custom_call.1} parent=63 // pred_check_branch
          %1047 = sbr.rel (%p1045) target = $region68
        $region67: #{tpu_custom_call.1} parent=63 // pred_region
          %s1048 = sand.u32 %s187, 1
          %s1049 = scalar_lea.sflag [#allocation5], %s1048
          %s1050 = sand.u32 %s187, 1
          %s1051 = smul.addr %s1050, 64
          %s1052 = scalar_lea.vmem [#allocation8], %s1051
          %1053 = dma.done %s1049, 1024
        $region68: #{tpu_custom_call.1} parent=63 // pred_fallthru
          _
      $region64: #{tpu_custom_call.1} parent=5 // pred_fallthru
        _
    $region6: #{tpu_custom_call.1} parent=1 // loop_footer
      %s25 = sadd.s32 1, %s21
    $region7: #{tpu_custom_call.1} parent=1 // loop_footer_branch
      %20 = sbr.rel target = $region3
    $region8: #{tpu_custom_call.1} parent=1 // loop_exit
      _
    %1054 = vsyncpa [#allocation4], 1
    %s1055 = scalar_lea.sflag [#allocation4], 1
    %1056 = vsyncpa %s1055, 1
    %1057 = vsyncpa [#allocation7], 1
    %1058 = vsyncpa [#allocation5], 1
    %s1059 = scalar_lea.sflag [#allocation5], 1
    %1060 = vsyncpa %s1059, 1

</llo_original>
